<compile_context>
chip_gen: v5e
topology: v5e:2x2
jax: 0.10.0
libtpu: 0.0.40
codegen_flags: <defaults>
</compile_context>

<pallas_src>
import functools

import jax
import jax.numpy as jnp
from jax.experimental import pallas as pl
from jax.experimental.pallas import tpu as pltpu


def _channel_attention_kernel(x_ref,
                              w1a_ref, b1a_ref, w2a_ref, b2a_ref,
                              w1m_ref, b1m_ref, w2m_ref, b2m_ref,
                              o_ref, *, inv_hw):
    # x_ref block: (Bt, C, HW) -- spatial on lanes, channels on sublanes.
    x = x_ref[...]

    # AdaptiveAvgPool2d(1) / AdaptiveMaxPool2d(1): cross-lane reductions over
    # HW.  Mean accumulates in f32 only at (Bt, C) granularity; max is exact
    # in the input dtype -- no full-slab upcast copy.
    avg = jnp.sum(x, axis=-1, dtype=jnp.float32) * inv_hw    # (Bt, C) f32
    mxv = jnp.max(x, axis=-1).astype(jnp.float32)            # (Bt, C) f32

    def branch(v, w1, b1, w2, b2):
        # Linear -> ReLU -> Linear -> Sigmoid; weights stored as (in, out).
        hh = jnp.maximum(
            jnp.dot(v, w1, preferred_element_type=jnp.float32) + b1, 0.0)
        return jax.nn.sigmoid(
            jnp.dot(hh, w2, preferred_element_type=jnp.float32) + b2)

    z_avg = branch(avg, w1a_ref[...], b1a_ref[...], w2a_ref[...], b2a_ref[...])
    z_max = branch(mxv, w1m_ref[...], b1m_ref[...], w2m_ref[...], b2m_ref[...])

    scale = (z_avg + z_max).astype(x.dtype)                  # (Bt, C)
    # Single fused multiply-store over the resident slab; (Bt, C, 1) scale
    # broadcasts along lanes (HW).  One VPU pass, lane-dense vst.
    o_ref[...] = (x * scale[:, :, None]).astype(o_ref.dtype)


def _padded_2d_bytes(shape, itemsize):
    """VMEM footprint of a 2-D tile after (8, 128) padding."""
    r = ((shape[0] + 7) // 8) * 8
    c = ((shape[1] + 127) // 128) * 128
    return r * c * itemsize


def _pick_batch_tile(batch, per_batch_bytes, budget_bytes):
    """Largest divisor of `batch` that (a) fits the per-block VMEM budget and
    (b) leaves at least 2 grid steps when batch >= 2 (v7x megacore)."""
    cap = max(batch // 2, 1)
    bt = 1
    for d in range(1, cap + 1):
        if batch % d == 0 and d * per_batch_bytes <= budget_bytes:
            bt = d
    return bt


def channel_attention(x, params):
    """x: (B, C, H, W); params: 8 arrays as produced by init_params."""
    B, C, H, W = x.shape
    HW = H * W
    itemsize = x.dtype.itemsize

    w1a, b1a, w2a, b2a, w1m, b1m, w2m, b2m = params
    hidden = w1a.shape[1]

    # NCHW -> (B, C, HW): a free reshape (contiguous), NO transpose, so the op
    # touches HBM exactly twice (read x, write out).
    xr = x.reshape(B, C, HW)

    # Chip-derived VMEM budget: 2x input + 2x output double-buffered blocks
    # plus params must fit, with headroom, below physical VMEM.
    try:
        vmem_cap = int(pltpu.get_tpu_info().vmem_capacity_bytes)
    except Exception:
        vmem_cap = 64 << 20            # conservative (v7x per-TC)
    param_bytes = sum(_padded_2d_bytes(p.shape, p.dtype.itemsize)
                      for p in params)
    headroom = 8 << 20
    budget = max((vmem_cap - 2 * param_bytes - headroom) // 4, 1 << 20)
    budget = min(budget, 24 << 20)     # past the roofline knee already

    per_batch_bytes = C * HW * itemsize
    bt = _pick_batch_tile(B, per_batch_bytes, budget)
    n_blocks = B // bt
    block_bytes = bt * per_batch_bytes

    vmem_limit = 4 * block_bytes + 2 * param_bytes + (8 << 20)
    vmem_limit = int(min(max(vmem_limit, 16 << 20), vmem_cap))

    grid = (n_blocks,)
    in_specs = [pl.BlockSpec((bt, C, HW), lambda b: (b, 0, 0))]
    in_specs += [pl.BlockSpec(p.shape, lambda b: (0, 0)) for p in params]
    out_specs = pl.BlockSpec((bt, C, HW), lambda b: (b, 0, 0))

    cost = pl.CostEstimate(
        flops=int(3 * B * C * HW + 8 * B * C * hidden),
        transcendentals=int(2 * B * C),
        bytes_accessed=int(2 * B * C * HW * itemsize
                           + sum(p.size * p.dtype.itemsize for p in params)),
    )

    out = pl.pallas_call(
        functools.partial(_channel_attention_kernel, inv_hw=1.0 / HW),
        out_shape=jax.ShapeDtypeStruct((B, C, HW), x.dtype),
        grid=grid,
        in_specs=in_specs,
        out_specs=out_specs,
        compiler_params=pltpu.CompilerParams(
            dimension_semantics=("parallel",),
            vmem_limit_bytes=vmem_limit),
        cost_estimate=cost,
    )(xr, *params)

    return out.reshape(B, C, H, W)


def init_params(key, n_channels, reduction_ratio=16):
    hidden = max(n_channels // reduction_ratio, 1)
    ks = jax.random.split(key, 4)
    scale1 = 1.0 / jnp.sqrt(n_channels)
    scale2 = 1.0 / jnp.sqrt(hidden)
    # Weights stored as (in_features, out_features) so the kernel does
    # v @ W + b, matching PyTorch's v @ W_pt.T + b semantics.
    w1a = jax.random.normal(ks[0], (n_channels, hidden), jnp.float32) * scale1
    b1a = jnp.zeros((1, hidden), jnp.float32)
    w2a = jax.random.normal(ks[1], (hidden, n_channels), jnp.float32) * scale2
    b2a = jnp.zeros((1, n_channels), jnp.float32)
    w1m = jax.random.normal(ks[2], (n_channels, hidden), jnp.float32) * scale1
    b1m = jnp.zeros((1, hidden), jnp.float32)
    w2m = jax.random.normal(ks[3], (hidden, n_channels), jnp.float32) * scale2
    b2m = jnp.zeros((1, n_channels), jnp.float32)
    return (w1a, b1a, w2a, b2a, w1m, b1m, w2m, b2m)


def reference(x, params):
    # Plain-JAX reference of the PyTorch forward for verification.
    w1a, b1a, w2a, b2a, w1m, b1m, w2m, b2m = params
    avg = jnp.mean(x, axis=(2, 3))        # (B, C)
    mxv = jnp.max(x, axis=(2, 3))         # (B, C)

    def mlp(v, w1, b1, w2, b2):
        h = jnp.maximum(v @ w1 + b1, 0.0)
        return jax.nn.sigmoid(h @ w2 + b2)

    a = mlp(avg, w1a, b1a, w2a, b2a)
    m = mlp(mxv, w1m, b1m, w2m, b2m)
    return x * (a + m)[:, :, None, None]


if __name__ == "__main__":
    B, C, H, W = 2, 32, 16, 16            # reduction_ratio=16 -> hidden=2
    key = jax.random.PRNGKey(0)
    kx, kp = jax.random.split(key)
    x = jax.random.normal(kx, (B, C, H, W), jnp.float32)
    params = init_params(kp, C, reduction_ratio=16)

    out = channel_attention(x, params)
    out = jax.block_until_ready(out)

    ref = reference(x, params)
    assert out.shape == x.shape
    assert jnp.allclose(out, ref, atol=1e-5, rtol=1e-5), "mismatch vs reference"
    print("KERNEL_OK")
</pallas_src>

<mosaic_0001>
module attributes {stable_mosaic.version = 11 : i64} {
  func.func @_channel_attention_kernel(%arg0: i32, %arg1: memref<1x32x256xf32, #tpu.memory_space<vmem>>, %arg2: memref<32x2xf32, #tpu.memory_space<vmem>>, %arg3: memref<1x2xf32, #tpu.memory_space<vmem>>, %arg4: memref<2x32xf32, #tpu.memory_space<vmem>>, %arg5: memref<1x32xf32, #tpu.memory_space<vmem>>, %arg6: memref<32x2xf32, #tpu.memory_space<vmem>>, %arg7: memref<1x2xf32, #tpu.memory_space<vmem>>, %arg8: memref<2x32xf32, #tpu.memory_space<vmem>>, %arg9: memref<1x32xf32, #tpu.memory_space<vmem>>, %arg10: memref<1x32x256xf32, #tpu.memory_space<vmem>>) attributes {dimension_semantics = [#tpu.dimension_semantics<parallel>], iteration_bounds = array<i64: 2>, scalar_prefetch = 0 : i64, scratch_operands = 0 : i64, tpu.core_type = #tpu.core_type<tc>, window_params = [{transform_indices = @transform_0, window_bounds = array<i64: 1, 32, 256>}, {pipeline_mode = #tpu.pipeline_mode<synchronous>, transform_indices = @transform_1, window_bounds = array<i64: 32, 2>}, {pipeline_mode = #tpu.pipeline_mode<synchronous>, transform_indices = @transform_2, window_bounds = array<i64: 1, 2>}, {pipeline_mode = #tpu.pipeline_mode<synchronous>, transform_indices = @transform_3, window_bounds = array<i64: 2, 32>}, {pipeline_mode = #tpu.pipeline_mode<synchronous>, transform_indices = @transform_4, window_bounds = array<i64: 1, 32>}, {pipeline_mode = #tpu.pipeline_mode<synchronous>, transform_indices = @transform_5, window_bounds = array<i64: 32, 2>}, {pipeline_mode = #tpu.pipeline_mode<synchronous>, transform_indices = @transform_6, window_bounds = array<i64: 1, 2>}, {pipeline_mode = #tpu.pipeline_mode<synchronous>, transform_indices = @transform_7, window_bounds = array<i64: 2, 32>}, {pipeline_mode = #tpu.pipeline_mode<synchronous>, transform_indices = @transform_8, window_bounds = array<i64: 1, 32>}, {transform_indices = @transform_9, window_bounds = array<i64: 1, 32, 256>}]} {
    %c0 = arith.constant 0 : index
    %c0_0 = arith.constant 0 : index
    %c0_1 = arith.constant 0 : index
    %0 = vector.load %arg1[%c0, %c0_0, %c0_1] : memref<1x32x256xf32, #tpu.memory_space<vmem>>, vector<1x32x256xf32>
    %cst = arith.constant dense<0.000000e+00> : vector<1x32xf32>
    %1 = vector.multi_reduction <add>, %0, %cst [2] : vector<1x32x256xf32> to vector<1x32xf32>
    %cst_2 = arith.constant 3.906250e-03 : f32
    %2 = vector.broadcast %cst_2 : f32 to vector<1x32xf32>
    %3 = arith.mulf %1, %2 : vector<1x32xf32>
    %cst_3 = arith.constant dense<0xFF800000> : vector<1x32xf32>
    %4 = vector.multi_reduction <maximumf>, %0, %cst_3 [2] : vector<1x32x256xf32> to vector<1x32xf32>
    %c0_4 = arith.constant 0 : index
    %c0_5 = arith.constant 0 : index
    %5 = vector.load %arg2[%c0_4, %c0_5] : memref<32x2xf32, #tpu.memory_space<vmem>>, vector<32x2xf32>
    %c0_6 = arith.constant 0 : index
    %c0_7 = arith.constant 0 : index
    %6 = vector.load %arg3[%c0_6, %c0_7] : memref<1x2xf32, #tpu.memory_space<vmem>>, vector<1x2xf32>
    %c0_8 = arith.constant 0 : index
    %c0_9 = arith.constant 0 : index
    %7 = vector.load %arg4[%c0_8, %c0_9] : memref<2x32xf32, #tpu.memory_space<vmem>>, vector<2x32xf32>
    %c0_10 = arith.constant 0 : index
    %c0_11 = arith.constant 0 : index
    %8 = vector.load %arg5[%c0_10, %c0_11] : memref<1x32xf32, #tpu.memory_space<vmem>>, vector<1x32xf32>
    %cst_12 = arith.constant dense<0.000000e+00> : vector<1x2xf32>
    %9 = tpu.matmul %3, %5, %cst_12 {dimension_numbers = #tpu.dot_dimension_numbers<[1], [0], [0], [1], [0, 0, 1, 1], [], []>} : vector<1x32xf32>, vector<32x2xf32>, vector<1x2xf32> -> vector<1x2xf32>
    %10 = arith.addf %9, %6 : vector<1x2xf32>
    %cst_13 = arith.constant 0.000000e+00 : f32
    %11 = vector.broadcast %cst_13 : f32 to vector<1x2xf32>
    %12 = arith.maximumf %10, %11 : vector<1x2xf32>
    %cst_14 = arith.constant dense<0.000000e+00> : vector<1x32xf32>
    %13 = tpu.matmul %12, %7, %cst_14 {dimension_numbers = #tpu.dot_dimension_numbers<[1], [0], [0], [1], [0, 0, 1, 1], [], []>} : vector<1x2xf32>, vector<2x32xf32>, vector<1x32xf32> -> vector<1x32xf32>
    %14 = arith.addf %13, %8 : vector<1x32xf32>
    %15 = arith.negf %14 : vector<1x32xf32>
    %16 = math.exp %15 : vector<1x32xf32>
    %cst_15 = arith.constant 1.000000e+00 : f32
    %17 = vector.broadcast %cst_15 : f32 to vector<1x32xf32>
    %18 = arith.addf %17, %16 : vector<1x32xf32>
    %19 = arith.divf %17, %18 : vector<1x32xf32>
    %c0_16 = arith.constant 0 : index
    %c0_17 = arith.constant 0 : index
    %20 = vector.load %arg6[%c0_16, %c0_17] : memref<32x2xf32, #tpu.memory_space<vmem>>, vector<32x2xf32>
    %c0_18 = arith.constant 0 : index
    %c0_19 = arith.constant 0 : index
    %21 = vector.load %arg7[%c0_18, %c0_19] : memref<1x2xf32, #tpu.memory_space<vmem>>, vector<1x2xf32>
    %c0_20 = arith.constant 0 : index
    %c0_21 = arith.constant 0 : index
    %22 = vector.load %arg8[%c0_20, %c0_21] : memref<2x32xf32, #tpu.memory_space<vmem>>, vector<2x32xf32>
    %c0_22 = arith.constant 0 : index
    %c0_23 = arith.constant 0 : index
    %23 = vector.load %arg9[%c0_22, %c0_23] : memref<1x32xf32, #tpu.memory_space<vmem>>, vector<1x32xf32>
    %cst_24 = arith.constant dense<0.000000e+00> : vector<1x2xf32>
    %24 = tpu.matmul %4, %20, %cst_24 {dimension_numbers = #tpu.dot_dimension_numbers<[1], [0], [0], [1], [0, 0, 1, 1], [], []>} : vector<1x32xf32>, vector<32x2xf32>, vector<1x2xf32> -> vector<1x2xf32>
    %25 = arith.addf %24, %21 : vector<1x2xf32>
    %cst_25 = arith.constant 0.000000e+00 : f32
    %26 = vector.broadcast %cst_25 : f32 to vector<1x2xf32>
    %27 = arith.maximumf %25, %26 : vector<1x2xf32>
    %cst_26 = arith.constant dense<0.000000e+00> : vector<1x32xf32>
    %28 = tpu.matmul %27, %22, %cst_26 {dimension_numbers = #tpu.dot_dimension_numbers<[1], [0], [0], [1], [0, 0, 1, 1], [], []>} : vector<1x2xf32>, vector<2x32xf32>, vector<1x32xf32> -> vector<1x32xf32>
    %29 = arith.addf %28, %23 : vector<1x32xf32>
    %30 = arith.negf %29 : vector<1x32xf32>
    %31 = math.exp %30 : vector<1x32xf32>
    %cst_27 = arith.constant 1.000000e+00 : f32
    %32 = vector.broadcast %cst_27 : f32 to vector<1x32xf32>
    %33 = arith.addf %32, %31 : vector<1x32xf32>
    %34 = arith.divf %32, %33 : vector<1x32xf32>
    %35 = arith.addf %19, %34 : vector<1x32xf32>
    %36 = vector.shape_cast %35 : vector<1x32xf32> to vector<1x32x1xf32>
    %37 = vector.broadcast %36 : vector<1x32x1xf32> to vector<1x32x256xf32>
    %38 = arith.mulf %0, %37 : vector<1x32x256xf32>
    %c0_28 = arith.constant 0 : index
    %c0_29 = arith.constant 0 : index
    %c0_30 = arith.constant 0 : index
    %39 = vector.load %arg10[%c0_28, %c0_29, %c0_30] : memref<1x32x256xf32, #tpu.memory_space<vmem>>, vector<1x32x256xf32>
    tpu.vector_store %arg10[%c0_28, %c0_29, %c0_30], %38 {strides = array<i32>} : memref<1x32x256xf32, #tpu.memory_space<vmem>>, vector<1x32x256xf32>,
    return
  }
  func.func @transform_0(%arg0: i32) -> (i32, i32, i32) {
    %c0_i32 = arith.constant 0 : i32
    %c0_i32_0 = arith.constant 0 : i32
    %c0_i32_1 = arith.constant 0 : i32
    return %arg0, %c0_i32, %c0_i32_0 : i32, i32, i32
  }
  func.func @transform_1(%arg0: i32) -> (i32, i32) {
    %c0_i32 = arith.constant 0 : i32
    %c0_i32_0 = arith.constant 0 : i32
    %c0_i32_1 = arith.constant 0 : i32
    return %c0_i32, %c0_i32_0 : i32, i32
  }
  func.func @transform_2(%arg0: i32) -> (i32, i32) {
    %c0_i32 = arith.constant 0 : i32
    %c0_i32_0 = arith.constant 0 : i32
    %c0_i32_1 = arith.constant 0 : i32
    return %c0_i32, %c0_i32_0 : i32, i32
  }
  func.func @transform_3(%arg0: i32) -> (i32, i32) {
    %c0_i32 = arith.constant 0 : i32
    %c0_i32_0 = arith.constant 0 : i32
    %c0_i32_1 = arith.constant 0 : i32
    return %c0_i32, %c0_i32_0 : i32, i32
  }
  func.func @transform_4(%arg0: i32) -> (i32, i32) {
    %c0_i32 = arith.constant 0 : i32
    %c0_i32_0 = arith.constant 0 : i32
    %c0_i32_1 = arith.constant 0 : i32
    return %c0_i32, %c0_i32_0 : i32, i32
  }
  func.func @transform_5(%arg0: i32) -> (i32, i32) {
    %c0_i32 = arith.constant 0 : i32
    %c0_i32_0 = arith.constant 0 : i32
    %c0_i32_1 = arith.constant 0 : i32
    return %c0_i32, %c0_i32_0 : i32, i32
  }
  func.func @transform_6(%arg0: i32) -> (i32, i32) {
    %c0_i32 = arith.constant 0 : i32
    %c0_i32_0 = arith.constant 0 : i32
    %c0_i32_1 = arith.constant 0 : i32
    return %c0_i32, %c0_i32_0 : i32, i32
  }
  func.func @transform_7(%arg0: i32) -> (i32, i32) {
    %c0_i32 = arith.constant 0 : i32
    %c0_i32_0 = arith.constant 0 : i32
    %c0_i32_1 = arith.constant 0 : i32
    return %c0_i32, %c0_i32_0 : i32, i32
  }
  func.func @transform_8(%arg0: i32) -> (i32, i32) {
    %c0_i32 = arith.constant 0 : i32
    %c0_i32_0 = arith.constant 0 : i32
    %c0_i32_1 = arith.constant 0 : i32
    return %c0_i32, %c0_i32_0 : i32, i32
  }
  func.func @transform_9(%arg0: i32) -> (i32, i32, i32) {
    %c0_i32 = arith.constant 0 : i32
    %c0_i32_0 = arith.constant 0 : i32
    %c0_i32_1 = arith.constant 0 : i32
    return %arg0, %c0_i32, %c0_i32_0 : i32, i32, i32
  }
}

</mosaic_0001>

<llo_original>
// kernel: tpu_custom_call.1
$region0: #{tpu_custom_call.1}
  #allocation0 [shape = 'u32[]', space=smem, size = 0x4, offset = 0x4, fixed_abs, tag = 'smem constant byte address 0x4 - core index']
  #allocation1 [shape = 'u32[72,128]{1,0:T(1,128)}', space=vmem, size = 0x9000, scoped, tag = 'internal scratch']
  %s0 = inlined_call_operand.hbm [shape: f32[2,32,256], index: 0, kind: input, shape index: {}]
  %s1 = inlined_call_operand.vmem [shape: f32[32,2], index: 1, kind: input, shape index: {}]
  %s2 = inlined_call_operand.vmem [shape: f32[1,2], index: 2, kind: input, shape index: {}]
  %s3 = inlined_call_operand.vmem [shape: f32[2,32], index: 3, kind: input, shape index: {}]
  %s4 = inlined_call_operand.vmem [shape: f32[1,32], index: 4, kind: input, shape index: {}]
  %s5 = inlined_call_operand.vmem [shape: f32[32,2], index: 5, kind: input, shape index: {}]
  %s6 = inlined_call_operand.vmem [shape: f32[1,2], index: 6, kind: input, shape index: {}]
  %s7 = inlined_call_operand.vmem [shape: f32[2,32], index: 7, kind: input, shape index: {}]
  %s8 = inlined_call_operand.vmem [shape: f32[1,32], index: 8, kind: input, shape index: {}]
  %s9 = inlined_call_operand.hbm [shape: f32[2,32,256], index: 9, kind: output, shape index: {}]
  %s10 = sld [smem:[#allocation0]]
  $region73: #{tpu_custom_call.1} parent=0
    _
  %s12 = ssub.s32 1, %s10
  %s13 = scalar_select 0, %s12, %s10
  $region1: #{tpu_custom_call.1} parent=0
    #allocation2 [shape = 'u8[65536]{0}', space=vmem, size = 0x10000, scoped, tag = 'input window, operand 0']
    #allocation3 [shape = 's32[2]{0}', space=sflag, size = 0x8, scoped, tag = 'scoped memory for tpu_custom_call.1']
    #allocation4 [shape = 's32[2]{0}', space=sflag, size = 0x8, scoped, tag = 'scoped memory for tpu_custom_call.1']
    #allocation5 [shape = 'u8[65536]{0}', space=vmem, size = 0x10000, scoped, tag = 'output window, operand 0']
    %14 = vsyncpa [#allocation3], 0
    %s15 = scalar_lea.sflag [#allocation3], 1
    %16 = vsyncpa %s15, 0
    %17 = vsyncpa [#allocation4], 0
    %s18 = scalar_lea.sflag [#allocation4], 1
    %19 = vsyncpa %s18, 0
    loop: start=0, step=1, limit=4
    $region2: #{tpu_custom_call.1} parent=1 // loop_pre_header
      _
    $region3: #{tpu_custom_call.1} parent=1 // loop_header
      %s21 = sphi 0, %s25
      %p22 = scmp.ge.s32.totalorder %s21, 4
      %s31 = sphi 0, %s33
      %s34 = sphi 0, %s31
      %s35 = sphi 0, %s34
      %s51 = sphi 0, %s35
      %s55 = sphi 0, %s55
      %s57 = sphi 0, %s55
      %s58 = sphi 0, %s57
      %s72 = sphi 0, %s58
      %s76 = sphi 0, %s76
      %s78 = sphi 0, %s76
      %s79 = sphi 0, %s78
      %s93 = sphi 0, %s79
      %s97 = sphi 0, %s97
      %s99 = sphi 0, %s97
      %s100 = sphi 0, %s99
      %s114 = sphi 0, %s100
      %s118 = sphi 0, %s118
      %s120 = sphi 0, %s118
      %s121 = sphi 0, %s120
      %s135 = sphi 0, %s121
      %s139 = sphi 0, %s139
      %s141 = sphi 0, %s139
      %s142 = sphi 0, %s141
      %s156 = sphi 0, %s142
      %s160 = sphi 0, %s160
      %s162 = sphi 0, %s160
      %s163 = sphi 0, %s162
      %s177 = sphi 0, %s163
      %s181 = sphi 0, %s181
      %s183 = sphi 0, %s181
      %s184 = sphi 0, %s183
      %s198 = sphi 0, %s184
      %s202 = sphi 0, %s202
      %s204 = sphi 0, %s202
      %s205 = sphi 0, %s204
      %s219 = sphi 0, %s205
      %s225 = sphi 0, %s227
      %s228 = sphi 0, %s225
      %s229 = sphi 0, %s228
      %s245 = sphi 0, %s229
    $region4: #{tpu_custom_call.1} parent=1 // loop_header_branch
      %24 = sbr.rel (%p22) target = $region8
    $region5: #{tpu_custom_call.1} parent=1 // loop_body
      %s26 = ssub.s32 %s21, 1
      %s27 = ssub.s32 %s21, 2
      %s28 = sadd.s32 %s21, 1
      %s29 = ssub.s32 %s21, %s28
      %p30 = scmp.eq.s32.totalorder %s29, 0
      %s32 = sadd.s32 %s31, 1
      %s33 = scalar_select %p30, %s31, %s32
      %p36 = pneg %p30
      %p37 = scmp.eq.s32.totalorder %s21, 1
      %p38 = por %p36, %p37
      %p39 = scmp.ne.s32.totalorder %s31, %s34
      %p40 = scmp.eq.s32.totalorder %s21, 0
      %p41 = por %p39, %p40
      %p42 = scmp.ne.s32.totalorder %s31, %s34
      %p43 = scmp.eq.s32.totalorder %s26, 1
      %p44 = por %p42, %p43
      %p45 = scmp.ne.s32.totalorder %s34, %s35
      %p46 = scmp.eq.s32.totalorder %s26, 0
      %p47 = por %p45, %p46
      %p48 = scmp.ne.s32.totalorder %s34, %s35
      %p49 = scmp.eq.s32.totalorder %s27, 1
      %p50 = por %p48, %p49
      %p52 = scmp.ne.s32.totalorder %s35, %s51
      %p53 = scmp.eq.s32.totalorder %s27, 0
      %p54 = por %p52, %p53
      %s56 = sadd.s32 %s55, 1
      %p59 = scmp.eq.s32.totalorder %s21, 1
      %p60 = scmp.ne.s32.totalorder %s55, %s57
      %p61 = scmp.eq.s32.totalorder %s21, 0
      %p62 = por %p60, %p61
      %p63 = scmp.ne.s32.totalorder %s55, %s57
      %p64 = scmp.eq.s32.totalorder %s26, 1
      %p65 = por %p63, %p64
      %p66 = scmp.ne.s32.totalorder %s57, %s58
      %p67 = scmp.eq.s32.totalorder %s26, 0
      %p68 = por %p66, %p67
      %p69 = scmp.ne.s32.totalorder %s57, %s58
      %p70 = scmp.eq.s32.totalorder %s27, 1
      %p71 = por %p69, %p70
      %p73 = scmp.ne.s32.totalorder %s58, %s72
      %p74 = scmp.eq.s32.totalorder %s27, 0
      %p75 = por %p73, %p74
      %s77 = sadd.s32 %s76, 1
      %p80 = scmp.eq.s32.totalorder %s21, 1
      %p81 = scmp.ne.s32.totalorder %s76, %s78
      %p82 = scmp.eq.s32.totalorder %s21, 0
      %p83 = por %p81, %p82
      %p84 = scmp.ne.s32.totalorder %s76, %s78
      %p85 = scmp.eq.s32.totalorder %s26, 1
      %p86 = por %p84, %p85
      %p87 = scmp.ne.s32.totalorder %s78, %s79
      %p88 = scmp.eq.s32.totalorder %s26, 0
      %p89 = por %p87, %p88
      %p90 = scmp.ne.s32.totalorder %s78, %s79
      %p91 = scmp.eq.s32.totalorder %s27, 1
      %p92 = por %p90, %p91
      %p94 = scmp.ne.s32.totalorder %s79, %s93
      %p95 = scmp.eq.s32.totalorder %s27, 0
      %p96 = por %p94, %p95
      %s98 = sadd.s32 %s97, 1
      %p101 = scmp.eq.s32.totalorder %s21, 1
      %p102 = scmp.ne.s32.totalorder %s97, %s99
      %p103 = scmp.eq.s32.totalorder %s21, 0
      %p104 = por %p102, %p103
      %p105 = scmp.ne.s32.totalorder %s97, %s99
      %p106 = scmp.eq.s32.totalorder %s26, 1
      %p107 = por %p105, %p106
      %p108 = scmp.ne.s32.totalorder %s99, %s100
      %p109 = scmp.eq.s32.totalorder %s26, 0
      %p110 = por %p108, %p109
      %p111 = scmp.ne.s32.totalorder %s99, %s100
      %p112 = scmp.eq.s32.totalorder %s27, 1
      %p113 = por %p111, %p112
      %p115 = scmp.ne.s32.totalorder %s100, %s114
      %p116 = scmp.eq.s32.totalorder %s27, 0
      %p117 = por %p115, %p116
      %s119 = sadd.s32 %s118, 1
      %p122 = scmp.eq.s32.totalorder %s21, 1
      %p123 = scmp.ne.s32.totalorder %s118, %s120
      %p124 = scmp.eq.s32.totalorder %s21, 0
      %p125 = por %p123, %p124
      %p126 = scmp.ne.s32.totalorder %s118, %s120
      %p127 = scmp.eq.s32.totalorder %s26, 1
      %p128 = por %p126, %p127
      %p129 = scmp.ne.s32.totalorder %s120, %s121
      %p130 = scmp.eq.s32.totalorder %s26, 0
      %p131 = por %p129, %p130
      %p132 = scmp.ne.s32.totalorder %s120, %s121
      %p133 = scmp.eq.s32.totalorder %s27, 1
      %p134 = por %p132, %p133
      %p136 = scmp.ne.s32.totalorder %s121, %s135
      %p137 = scmp.eq.s32.totalorder %s27, 0
      %p138 = por %p136, %p137
      %s140 = sadd.s32 %s139, 1
      %p143 = scmp.eq.s32.totalorder %s21, 1
      %p144 = scmp.ne.s32.totalorder %s139, %s141
      %p145 = scmp.eq.s32.totalorder %s21, 0
      %p146 = por %p144, %p145
      %p147 = scmp.ne.s32.totalorder %s139, %s141
      %p148 = scmp.eq.s32.totalorder %s26, 1
      %p149 = por %p147, %p148
      %p150 = scmp.ne.s32.totalorder %s141, %s142
      %p151 = scmp.eq.s32.totalorder %s26, 0
      %p152 = por %p150, %p151
      %p153 = scmp.ne.s32.totalorder %s141, %s142
      %p154 = scmp.eq.s32.totalorder %s27, 1
      %p155 = por %p153, %p154
      %p157 = scmp.ne.s32.totalorder %s142, %s156
      %p158 = scmp.eq.s32.totalorder %s27, 0
      %p159 = por %p157, %p158
      %s161 = sadd.s32 %s160, 1
      %p164 = scmp.eq.s32.totalorder %s21, 1
      %p165 = scmp.ne.s32.totalorder %s160, %s162
      %p166 = scmp.eq.s32.totalorder %s21, 0
      %p167 = por %p165, %p166
      %p168 = scmp.ne.s32.totalorder %s160, %s162
      %p169 = scmp.eq.s32.totalorder %s26, 1
      %p170 = por %p168, %p169
      %p171 = scmp.ne.s32.totalorder %s162, %s163
      %p172 = scmp.eq.s32.totalorder %s26, 0
      %p173 = por %p171, %p172
      %p174 = scmp.ne.s32.totalorder %s162, %s163
      %p175 = scmp.eq.s32.totalorder %s27, 1
      %p176 = por %p174, %p175
      %p178 = scmp.ne.s32.totalorder %s163, %s177
      %p179 = scmp.eq.s32.totalorder %s27, 0
      %p180 = por %p178, %p179
      %s182 = sadd.s32 %s181, 1
      %p185 = scmp.eq.s32.totalorder %s21, 1
      %p186 = scmp.ne.s32.totalorder %s181, %s183
      %p187 = scmp.eq.s32.totalorder %s21, 0
      %p188 = por %p186, %p187
      %p189 = scmp.ne.s32.totalorder %s181, %s183
      %p190 = scmp.eq.s32.totalorder %s26, 1
      %p191 = por %p189, %p190
      %p192 = scmp.ne.s32.totalorder %s183, %s184
      %p193 = scmp.eq.s32.totalorder %s26, 0
      %p194 = por %p192, %p193
      %p195 = scmp.ne.s32.totalorder %s183, %s184
      %p196 = scmp.eq.s32.totalorder %s27, 1
      %p197 = por %p195, %p196
      %p199 = scmp.ne.s32.totalorder %s184, %s198
      %p200 = scmp.eq.s32.totalorder %s27, 0
      %p201 = por %p199, %p200
      %s203 = sadd.s32 %s202, 1
      %p206 = scmp.eq.s32.totalorder %s21, 1
      %p207 = scmp.ne.s32.totalorder %s202, %s204
      %p208 = scmp.eq.s32.totalorder %s21, 0
      %p209 = por %p207, %p208
      %p210 = scmp.ne.s32.totalorder %s202, %s204
      %p211 = scmp.eq.s32.totalorder %s26, 1
      %p212 = por %p210, %p211
      %p213 = scmp.ne.s32.totalorder %s204, %s205
      %p214 = scmp.eq.s32.totalorder %s26, 0
      %p215 = por %p213, %p214
      %p216 = scmp.ne.s32.totalorder %s204, %s205
      %p217 = scmp.eq.s32.totalorder %s27, 1
      %p218 = por %p216, %p217
      %p220 = scmp.ne.s32.totalorder %s205, %s219
      %p221 = scmp.eq.s32.totalorder %s27, 0
      %p222 = por %p220, %p221
      %s223 = ssub.s32 %s21, %s28
      %p224 = scmp.eq.s32.totalorder %s223, 0
      %s226 = sadd.s32 %s225, 1
      %s227 = scalar_select %p224, %s225, %s226
      %p230 = pneg %p224
      %p231 = scmp.eq.s32.totalorder %s21, 1
      %p232 = por %p230, %p231
      %p233 = scmp.ne.s32.totalorder %s225, %s228
      %p234 = scmp.eq.s32.totalorder %s21, 0
      %p235 = por %p233, %p234
      %p236 = scmp.ne.s32.totalorder %s225, %s228
      %p237 = scmp.eq.s32.totalorder %s26, 1
      %p238 = por %p236, %p237
      %p239 = scmp.ne.s32.totalorder %s228, %s229
      %p240 = scmp.eq.s32.totalorder %s26, 0
      %p241 = por %p239, %p240
      %p242 = scmp.ne.s32.totalorder %s228, %s229
      %p243 = scmp.eq.s32.totalorder %s27, 1
      %p244 = por %p242, %p243
      %p246 = scmp.ne.s32.totalorder %s229, %s245
      %p247 = scmp.eq.s32.totalorder %s27, 0
      %p248 = por %p246, %p247
      %p249 = scmp.le.s32.totalorder 1, %s21
      %p250 = scmp.lt.s32.totalorder %s21, 3
      %p251 = pnand %p249, %p250
      %p252 = pneg %p251
      // Predicated region
      $region9: #{tpu_custom_call.1} parent=5 // pred_check
        _
      $region10: #{tpu_custom_call.1} parent=5 // pred_check_branch
        %254 = sbr.rel (%p251) target = $region12
      $region11: #{tpu_custom_call.1} parent=5 // pred_region
        %s255 = ssub.s32 %s21, 1
        // Predicated region
        $region13: #{tpu_custom_call.1} parent=11 // pred_check
          %p256 = pneg %p68
        $region14: #{tpu_custom_call.1} parent=11 // pred_check_branch
          %258 = sbr.rel (%p256) target = $region16
        $region15: #{tpu_custom_call.1} parent=11 // pred_region
          _
        $region16: #{tpu_custom_call.1} parent=11 // pred_fallthru
          _
        // Predicated region
        $region17: #{tpu_custom_call.1} parent=11 // pred_check
          %p259 = pneg %p89
        $region18: #{tpu_custom_call.1} parent=11 // pred_check_branch
          %261 = sbr.rel (%p259) target = $region20
        $region19: #{tpu_custom_call.1} parent=11 // pred_region
          _
        $region20: #{tpu_custom_call.1} parent=11 // pred_fallthru
          _
        // Predicated region
        $region21: #{tpu_custom_call.1} parent=11 // pred_check
          %p262 = pneg %p110
        $region22: #{tpu_custom_call.1} parent=11 // pred_check_branch
          %264 = sbr.rel (%p262) target = $region24
        $region23: #{tpu_custom_call.1} parent=11 // pred_region
          _
        $region24: #{tpu_custom_call.1} parent=11 // pred_fallthru
          _
        // Predicated region
        $region25: #{tpu_custom_call.1} parent=11 // pred_check
          %p265 = pneg %p131
        $region26: #{tpu_custom_call.1} parent=11 // pred_check_branch
          %267 = sbr.rel (%p265) target = $region28
        $region27: #{tpu_custom_call.1} parent=11 // pred_region
          _
        $region28: #{tpu_custom_call.1} parent=11 // pred_fallthru
          _
        // Predicated region
        $region29: #{tpu_custom_call.1} parent=11 // pred_check
          %p268 = pneg %p152
        $region30: #{tpu_custom_call.1} parent=11 // pred_check_branch
          %270 = sbr.rel (%p268) target = $region32
        $region31: #{tpu_custom_call.1} parent=11 // pred_region
          _
        $region32: #{tpu_custom_call.1} parent=11 // pred_fallthru
          _
        // Predicated region
        $region33: #{tpu_custom_call.1} parent=11 // pred_check
          %p271 = pneg %p173
        $region34: #{tpu_custom_call.1} parent=11 // pred_check_branch
          %273 = sbr.rel (%p271) target = $region36
        $region35: #{tpu_custom_call.1} parent=11 // pred_region
          _
        $region36: #{tpu_custom_call.1} parent=11 // pred_fallthru
          _
        // Predicated region
        $region37: #{tpu_custom_call.1} parent=11 // pred_check
          %p274 = pneg %p194
        $region38: #{tpu_custom_call.1} parent=11 // pred_check_branch
          %276 = sbr.rel (%p274) target = $region40
        $region39: #{tpu_custom_call.1} parent=11 // pred_region
          _
        $region40: #{tpu_custom_call.1} parent=11 // pred_fallthru
          _
        // Predicated region
        $region41: #{tpu_custom_call.1} parent=11 // pred_check
          %p277 = pneg %p215
        $region42: #{tpu_custom_call.1} parent=11 // pred_check_branch
          %279 = sbr.rel (%p277) target = $region44
        $region43: #{tpu_custom_call.1} parent=11 // pred_region
          _
        $region44: #{tpu_custom_call.1} parent=11 // pred_fallthru
          _
      $region12: #{tpu_custom_call.1} parent=5 // pred_fallthru
        _
      %p280 = scmp.lt.s32.totalorder %s21, 2
      // Predicated region
      $region45: #{tpu_custom_call.1} parent=5 // pred_check
        %p281 = pneg %p280
      $region46: #{tpu_custom_call.1} parent=5 // pred_check_branch
        %283 = sbr.rel (%p281) target = $region48
      $region47: #{tpu_custom_call.1} parent=5 // pred_region
        // Predicated region
        $region49: #{tpu_custom_call.1} parent=47 // pred_check
          %p284 = pneg %p41
        $region50: #{tpu_custom_call.1} parent=47 // pred_check_branch
          %286 = sbr.rel (%p284) target = $region52
        $region51: #{tpu_custom_call.1} parent=47 // pred_region
          %s287 = sand.u32 %s31, 1
          %s288 = scalar_lea.sflag [#allocation3], %s287
          %s289 = sand.u32 %s31, 1
          %s290 = smul.addr %s289, 64
          %s291 = scalar_lea.vmem [#allocation2], %s290
          %293 = vsyncadd %s288, 0
          %s294 = smul.addr %s21, 8
          %s295 = smul.addr %s294, 8
          %s296 = scalar_lea.hbm %s0, %s295
          %s297 = sshll.u32 %s296, 4
          %s298 = int_to_ptr.hbm [resolvable:$true] %s297
          %s299 = sshll.u32 %s291, 4
          %s300 = int_to_ptr.vmem [resolvable:$true] %s299
          %305 = dma.hbm_to_vmem [thread:$0]  %s298, 1024, %s300, %s288, 256, 256, 16
        $region52: #{tpu_custom_call.1} parent=47 // pred_fallthru
          _
      $region48: #{tpu_custom_call.1} parent=5 // pred_fallthru
        _
      %p306 = scmp.le.s32.totalorder 1, %s21
      %p307 = scmp.lt.s32.totalorder %s21, 3
      %p308 = pnand %p306, %p307
      %p309 = pneg %p308
      // Predicated region
      $region53: #{tpu_custom_call.1} parent=5 // pred_check
        _
      $region54: #{tpu_custom_call.1} parent=5 // pred_check_branch
        %311 = sbr.rel (%p308) target = $region56
      $region55: #{tpu_custom_call.1} parent=5 // pred_region
        %s312 = ssub.s32 %s21, 1
        %s313 = sand.u32 %s34, 1
        %s314 = scalar_lea.sflag [#allocation3], %s313
        %s315 = sand.u32 %s34, 1
        %s316 = smul.addr %s315, 64
        %s317 = scalar_lea.vmem [#allocation2], %s316
        // Predicated region
        $region57: #{tpu_custom_call.1} parent=55 // pred_check
          %p318 = pneg %p47
        $region58: #{tpu_custom_call.1} parent=55 // pred_check_branch
          %320 = sbr.rel (%p318) target = $region60
        $region59: #{tpu_custom_call.1} parent=55 // pred_region
          %322 = dma.done %s314, 1024
        $region60: #{tpu_custom_call.1} parent=55 // pred_fallthru
          _
        %s323 = sand.u32 %s34, 1
        %s324 = scalar_lea.sflag [#allocation3], %s323
        %s325 = sand.u32 %s34, 1
        %s326 = smul.addr %s325, 64
        %s327 = scalar_lea.vmem [#allocation2], %s326
        %p328 = pneg %p47
        %p329 = pneg %p44
        %p330 = pneg %p68
        %p331 = pneg %p65
        %p332 = pneg %p89
        %p333 = pneg %p86
        %p334 = pneg %p110
        %p335 = pneg %p107
        %p336 = pneg %p131
        %p337 = pneg %p128
        %p338 = pneg %p152
        %p339 = pneg %p149
        %p340 = pneg %p173
        %p341 = pneg %p170
        %p342 = pneg %p194
        %p343 = pneg %p191
        %p344 = pneg %p215
        %p345 = pneg %p212
        %p346 = pneg %p241
        %p347 = pneg %p238
        %s348 = sand.u32 %s228, 1
        %s349 = scalar_lea.sflag [#allocation4], %s348
        %s350 = sand.u32 %s228, 1
        %s351 = smul.addr %s350, 64
        %s352 = scalar_lea.vmem [#allocation5], %s351
        %v353 = vld [vmem:[%s317] sm:$0xff]
        %v354 = vld [vmem:[%s317 + $0x8] sm:$0xff]
        %v355 = vld [vmem:[%s317 + $0x10] sm:$0xff]
        %v356 = vld [vmem:[%s317 + $0x18] sm:$0xff]
        %v357 = vld [vmem:[%s317 + $0x20] sm:$0xff]
        %v358 = vld [vmem:[%s317 + $0x28] sm:$0xff]
        %v359 = vld [vmem:[%s317 + $0x30] sm:$0xff]
        %v360 = vld [vmem:[%s317 + $0x38] sm:$0xff]
        %v361 = vadd.f32 %v353, %v354
        %362 = vadd.xlane.f32.xlu0 %v361
        %v363 = vpop.xlane.xlu0 %362
        %v364 = vadd.f32 %v355, %v356
        %365 = vadd.xlane.f32.xlu0 %v364
        %v366 = vpop.xlane.xlu0 %365
        %v367 = vadd.f32 %v357, %v358
        %368 = vadd.xlane.f32.xlu0 %v367
        %v369 = vpop.xlane.xlu0 %368
        %v370 = vadd.f32 %v359, %v360
        %371 = vadd.xlane.f32.xlu0 %v370
        %v372 = vpop.xlane.xlu0 %371
        %v373 = vmul.f32 %v363, 0.00390625
        %v374 = vmul.f32 %v366, 0.00390625
        %v375 = vmul.f32 %v369, 0.00390625
        %v376 = vmul.f32 %v372, 0.00390625
        %v377 = vmax.f32 %v353, %v354
        %378 = vmax.xlane.f32.xlu0 %v377
        %v379 = vpop.xlane.xlu0 %378
        %v380 = vmax.f32 %v355, %v356
        %381 = vmax.xlane.f32.xlu0 %v380
        %v382 = vpop.xlane.xlu0 %381
        %v383 = vmax.f32 %v357, %v358
        %384 = vmax.xlane.f32.xlu0 %v383
        %v385 = vpop.xlane.xlu0 %384
        %v386 = vmax.f32 %v359, %v360
        %387 = vmax.xlane.f32.xlu0 %v386
        %v388 = vpop.xlane.xlu0 %387
        %v389 = vld [vmem:[%s1] sm:$0xff]
        %v390 = vld [vmem:[%s1 + $0x8] sm:$0xff]
        %v391 = vld [vmem:[%s1 + $0x10] sm:$0xff]
        %v392 = vld [vmem:[%s1 + $0x18] sm:$0xff]
        %v393 = vld [vmem:[%s2] sm:$0x1]
        %v394 = vld [vmem:[%s3] sm:$0x3]
        %v395 = vld [vmem:[%s4] sm:$0x1]
        %v400 = vlaneseq
        %v401 = vand.u32 %v400, 127
        %v402 = vperm.slane %v373, %v401
        %v403 = vadd.s32 %v401, 4294967288
        %v404 = vperm.slane %v374, %v403
        %vm405 = vcmask 130112
        %v406 = vsel %vm405, %v404, %v402
        %v407 = vadd.s32 %v401, 4294967280
        %v408 = vperm.slane %v375, %v407
        %vm409 = vcmask 195712
        %v410 = vsel %vm409, %v408, %v406
        %v411 = vadd.s32 %v401, 4294967272
        %v412 = vperm.slane %v376, %v411
        %vm413 = vcmask 261312
        %v414 = vsel %vm413, %v412, %v410
        %vm415 = vcmask 261120
        %v416 = vsel %vm415, %v414, 0
        %418 = vmatpush.msra.mxu0 0.0
        %419 = vmatpush.msra.mxu0 0.0
        %420 = vmatpush.msra.mxu0 0.0
        %421 = vmatpush.msra.mxu0 0.0
        %422 = vmatpush.msra.mxu0 0.0
        %423 = vmatpush.msra.mxu0 0.0
        %424 = vmatpush.msra.mxu0 0.0
        %425 = vmatpush.msra.mxu0 0.0
        %426 = vmatpush.msra.mxu0 0.0
        %427 = vmatpush.msra.mxu0 0.0
        %428 = vmatpush.msra.mxu0 0.0
        %429 = vmatpush.msra.mxu0 0.0
        %430 = vmatpush.msra.mxu0 %v392
        %431 = vmatpush.msra.mxu0 %v391
        %432 = vmatpush.msra.mxu0 %v390
        %433 = vmatpush.msra.mxu0 %v389
        %434 = vmatmul.f32.gmra.mxu0 %v416
        %v435 = vpop.f32.mrf.mxu0
        %v436 = vadd.f32 %v393, %v435
        %437 = vdwg.mxu0
        %v438 = vmax.f32 %v436, 0.0
        %vm439 = vcmask 15360
        %v441 = vsel %vm439, %v438, 0
        %vm443 = vcmask 1041408
        %v445 = vsel %vm443, %v394, 0
        %447 = vmatpush.msra.mxu0 0.0
        %448 = vmatpush.msra.mxu0 0.0
        %449 = vmatpush.msra.mxu0 0.0
        %450 = vmatpush.msra.mxu0 0.0
        %451 = vmatpush.msra.mxu0 0.0
        %452 = vmatpush.msra.mxu0 0.0
        %453 = vmatpush.msra.mxu0 0.0
        %454 = vmatpush.msra.mxu0 0.0
        %455 = vmatpush.msra.mxu0 0.0
        %456 = vmatpush.msra.mxu0 0.0
        %457 = vmatpush.msra.mxu0 0.0
        %458 = vmatpush.msra.mxu0 0.0
        %459 = vmatpush.msra.mxu0 0.0
        %460 = vmatpush.msra.mxu0 0.0
        %461 = vmatpush.msra.mxu0 0.0
        %462 = vmatpush.msra.mxu0 %v445
        %463 = vmatmul.f32.gmra.mxu0 %v441
        %v464 = vpop.f32.mrf.mxu0
        %v465 = vadd.f32 %v395, %v464
        %466 = vdwg.mxu0
        %v467 = vxor.u32 %v465, 2147483648
        %v468 = vmul.f32 %v467, 1.442695
        %v469 = vpow.pop %v468
        %v470 = vadd.f32 %v469, 1.0
        %v471 = vrcp.pop %v470
        %v472 = vmul.f32 %v470, %v471
        %v473 = vsub.f32 1.0, %v472
        %v474 = vmul.f32 %v471, %v473
        %v475 = vadd.f32 %v471, %v474
        %vm476 = vweird.f32 %v470
        %vm477 = vweird.f32 %v471
        %vm478 = vmor %vm476, %vm477
        %v479 = vsel %vm478, %v471, %v475
        %v480 = vand.u32 2147483647, %v470
        %vm481 = vcmp.eq.f32.partialorder %v480, 8.507059e+37
        %v482 = vand.u32 %v470, 2147483648
        %v483 = vor.u32 1.1754944e-38, %v482
        %v484 = vsel %vm481, %v483, %v479
        %v485 = vmul.f32 1.0, %v484
        %v486 = vld [vmem:[%s5] sm:$0xff]
        %v487 = vld [vmem:[%s5 + $0x8] sm:$0xff]
        %v488 = vld [vmem:[%s5 + $0x10] sm:$0xff]
        %v489 = vld [vmem:[%s5 + $0x18] sm:$0xff]
        %v490 = vld [vmem:[%s6] sm:$0x1]
        %v491 = vld [vmem:[%s7] sm:$0x3]
        %v492 = vld [vmem:[%s8] sm:$0x1]
        %v497 = vperm.slane %v379, %v401
        %v498 = vperm.slane %v382, %v403
        %v499 = vsel %vm405, %v498, %v497
        %v500 = vperm.slane %v385, %v407
        %v501 = vsel %vm409, %v500, %v499
        %v502 = vperm.slane %v388, %v411
        %v503 = vsel %vm413, %v502, %v501
        %v504 = vsel %vm415, %v503, 0
        %506 = vmatpush.msra.mxu0 0.0
        %507 = vmatpush.msra.mxu0 0.0
        %508 = vmatpush.msra.mxu0 0.0
        %509 = vmatpush.msra.mxu0 0.0
        %510 = vmatpush.msra.mxu0 0.0
        %511 = vmatpush.msra.mxu0 0.0
        %512 = vmatpush.msra.mxu0 0.0
        %513 = vmatpush.msra.mxu0 0.0
        %514 = vmatpush.msra.mxu0 0.0
        %515 = vmatpush.msra.mxu0 0.0
        %516 = vmatpush.msra.mxu0 0.0
        %517 = vmatpush.msra.mxu0 0.0
        %518 = vmatpush.msra.mxu0 %v489
        %519 = vmatpush.msra.mxu0 %v488
        %520 = vmatpush.msra.mxu0 %v487
        %521 = vmatpush.msra.mxu0 %v486
        %522 = vmatmul.f32.gmra.mxu0 %v504
        %v523 = vpop.f32.mrf.mxu0
        %v524 = vadd.f32 %v490, %v523
        %525 = vdwg.mxu0
        %v526 = vmax.f32 %v524, 0.0
        %v528 = vsel %vm439, %v526, 0
        %v531 = vsel %vm443, %v491, 0
        %533 = vmatpush.msra.mxu0 0.0
        %534 = vmatpush.msra.mxu0 0.0
        %535 = vmatpush.msra.mxu0 0.0
        %536 = vmatpush.msra.mxu0 0.0
        %537 = vmatpush.msra.mxu0 0.0
        %538 = vmatpush.msra.mxu0 0.0
        %539 = vmatpush.msra.mxu0 0.0
        %540 = vmatpush.msra.mxu0 0.0
        %541 = vmatpush.msra.mxu0 0.0
        %542 = vmatpush.msra.mxu0 0.0
        %543 = vmatpush.msra.mxu0 0.0
        %544 = vmatpush.msra.mxu0 0.0
        %545 = vmatpush.msra.mxu0 0.0
        %546 = vmatpush.msra.mxu0 0.0
        %547 = vmatpush.msra.mxu0 0.0
        %548 = vmatpush.msra.mxu0 %v531
        %549 = vmatmul.f32.gmra.mxu0 %v528
        %v550 = vpop.f32.mrf.mxu0
        %v551 = vadd.f32 %v492, %v550
        %552 = vdwg.mxu0
        %v553 = vxor.u32 %v551, 2147483648
        %v554 = vmul.f32 %v553, 1.442695
        %v555 = vpow.pop %v554
        %v556 = vadd.f32 %v555, 1.0
        %v557 = vrcp.pop %v556
        %v558 = vmul.f32 %v556, %v557
        %v559 = vsub.f32 1.0, %v558
        %v560 = vmul.f32 %v557, %v559
        %v561 = vadd.f32 %v557, %v560
        %vm562 = vweird.f32 %v556
        %vm563 = vweird.f32 %v557
        %vm564 = vmor %vm562, %vm563
        %v565 = vsel %vm564, %v557, %v561
        %v566 = vand.u32 2147483647, %v556
        %vm567 = vcmp.eq.f32.partialorder %v566, 8.507059e+37
        %v568 = vand.u32 %v556, 2147483648
        %v569 = vor.u32 1.1754944e-38, %v568
        %v570 = vsel %vm567, %v569, %v565
        %v571 = vmul.f32 1.0, %v570
        %v572 = vadd.f32 %v485, %v571
        %v573 = vperm.slane %v572, 0
        %v574 = vlaneseq
        %v575 = vshrl.u32 %v574, 7
        %577 = vset.pattern.permute.xlu0 %v575
        %578 = vperm.xlu0 %577, %v573
        %v579 = vpop.permute.xlu0 %578
        %v580 = vlaneseq
        %v581 = vshrl.u32 %v580, 7
        %v582 = vadd.s32 %v581, 8
        %583 = vset.pattern.permute.xlu0 %v582
        %584 = vperm.xlu0 %583, %v573
        %v585 = vpop.permute.xlu0 %584
        %v586 = vlaneseq
        %v587 = vshrl.u32 %v586, 7
        %v588 = vadd.s32 %v587, 16
        %589 = vset.pattern.permute.xlu0 %v588
        %590 = vperm.xlu0 %589, %v573
        %v591 = vpop.permute.xlu0 %590
        %v592 = vlaneseq
        %v593 = vshrl.u32 %v592, 7
        %v594 = vadd.s32 %v593, 24
        %595 = vset.pattern.permute.xlu0 %v594
        %596 = vperm.xlu0 %595, %v573
        %v597 = vpop.permute.xlu0 %596
        %v598 = vmul.f32 %v353, %v579
        %v599 = vmul.f32 %v354, %v579
        %v600 = vmul.f32 %v355, %v585
        %v601 = vmul.f32 %v356, %v585
        %v602 = vmul.f32 %v357, %v591
        %v603 = vmul.f32 %v358, %v591
        %v604 = vmul.f32 %v359, %v597
        %v605 = vmul.f32 %v360, %v597
        %606 = vst [vmem:[%s352] sm:$0xff] %v598
        %607 = vst [vmem:[%s352 + $0x8] sm:$0xff] %v599
        %608 = vst [vmem:[%s352 + $0x10] sm:$0xff] %v600
        %609 = vst [vmem:[%s352 + $0x18] sm:$0xff] %v601
        %610 = vst [vmem:[%s352 + $0x20] sm:$0xff] %v602
        %611 = vst [vmem:[%s352 + $0x28] sm:$0xff] %v603
        %612 = vst [vmem:[%s352 + $0x30] sm:$0xff] %v604
        %613 = vst [vmem:[%s352 + $0x38] sm:$0xff] %v605
        %s614 = sand.u32 %s228, 1
        %s615 = scalar_lea.sflag [#allocation4], %s614
        %s616 = sand.u32 %s228, 1
        %s617 = smul.addr %s616, 64
        %s618 = scalar_lea.vmem [#allocation5], %s617
        // Predicated region
        $region61: #{tpu_custom_call.1} parent=55 // pred_check
          %p619 = pneg %p238
        $region62: #{tpu_custom_call.1} parent=55 // pred_check_branch
          %621 = sbr.rel (%p619) target = $region64
        $region63: #{tpu_custom_call.1} parent=55 // pred_region
          %623 = vsyncadd %s615, 0
          %s624 = smul.addr %s26, 8
          %s625 = smul.addr %s624, 8
          %s626 = scalar_lea.hbm %s9, %s625
          %s627 = sshll.u32 %s618, 4
          %s628 = int_to_ptr.vmem [resolvable:$true] %s627
          %s629 = sshll.u32 %s626, 4
          %s630 = int_to_ptr.hbm [resolvable:$true] %s629
          %635 = dma.vmem_to_hbm [thread:$0]  %s628, 1024, %s630, %s615, 256, 256, 16
        $region64: #{tpu_custom_call.1} parent=55 // pred_fallthru
          _
      $region56: #{tpu_custom_call.1} parent=5 // pred_fallthru
        _
      %p636 = scmp.le.s32.totalorder 2, %s21
      // Predicated region
      $region65: #{tpu_custom_call.1} parent=5 // pred_check
        %p637 = pneg %p636
      $region66: #{tpu_custom_call.1} parent=5 // pred_check_branch
        %639 = sbr.rel (%p637) target = $region68
      $region67: #{tpu_custom_call.1} parent=5 // pred_region
        %s640 = ssub.s32 %s21, 2
        // Predicated region
        $region69: #{tpu_custom_call.1} parent=67 // pred_check
          %p641 = pneg %p244
        $region70: #{tpu_custom_call.1} parent=67 // pred_check_branch
          %643 = sbr.rel (%p641) target = $region72
        $region71: #{tpu_custom_call.1} parent=67 // pred_region
          %s644 = sand.u32 %s229, 1
          %s645 = scalar_lea.sflag [#allocation4], %s644
          %s646 = sand.u32 %s229, 1
          %s647 = smul.addr %s646, 64
          %s648 = scalar_lea.vmem [#allocation5], %s647
          %650 = dma.done %s645, 1024
        $region72: #{tpu_custom_call.1} parent=67 // pred_fallthru
          _
      $region68: #{tpu_custom_call.1} parent=5 // pred_fallthru
        _
    $region6: #{tpu_custom_call.1} parent=1 // loop_footer
      %s25 = sadd.s32 1, %s21
    $region7: #{tpu_custom_call.1} parent=1 // loop_footer_branch
      %20 = sbr.rel target = $region3
    $region8: #{tpu_custom_call.1} parent=1 // loop_exit
      _
    %651 = vsyncpa [#allocation3], 1
    %s652 = scalar_lea.sflag [#allocation3], 1
    %653 = vsyncpa %s652, 1
    %654 = vsyncpa [#allocation4], 1
    %s655 = scalar_lea.sflag [#allocation4], 1
    %656 = vsyncpa %s655, 1

</llo_original>
